<compile_context>
chip_gen: v7x
topology: tpu7x:2x2x1
jax: 0.10.0
libtpu: 0.0.40
codegen_flags: <defaults>
</compile_context>

<pallas_src>
import functools

import jax
import jax.numpy as jnp
from jax.experimental import pallas as pl
from jax.experimental.pallas import tpu as pltpu


def _cdiv(a, b):
    return (a + b - 1) // b


def _round_up(n, m):
    return ((n + m - 1) // m) * m


def _mlp_kernel(*refs, num_layers, relu_flags, normalize, use_bf16):
    """refs = (x_ref, w0, b0, w1, b1, ..., o_ref); whole MLP on one batch tile."""
    x_ref = refs[0]
    o_ref = refs[-1]
    wb_refs = refs[1:-1]

    h = x_ref[...].astype(jnp.float32)
    for i in range(num_layers):
        w_ref = wb_refs[2 * i]
        b_ref = wb_refs[2 * i + 1]
        if relu_flags[i]:
            h = jnp.maximum(h, 0.0)
        lhs = h.astype(jnp.bfloat16) if use_bf16 else h
        # MXU matmul, f32 accumulation; bias added once per output tile.
        h = jnp.dot(lhs, w_ref[...], preferred_element_type=jnp.float32)
        h = h + b_ref[...].astype(jnp.float32)      # b is (1, N) -> broadcast

    if normalize:
        # F.normalize(x, p=2, dim=1): x / max(||x||_2, eps), eps = 1e-12.
        # x * rsqrt(max(sumsq, eps^2)) is the same to f32 rounding; rsqrt goes
        # to the EUP (free slot).
        sumsq = jnp.sum(h * h, axis=-1, keepdims=True)
        h = h * jax.lax.rsqrt(jnp.maximum(sumsq, 1e-24))

    o_ref[...] = h.astype(o_ref.dtype)


def init_mlp_params(key, layer_sizes):
    """PyTorch-style init: U(-1/sqrt(fan_in), 1/sqrt(fan_in)).
    Weights are stored already transposed as (in, out)."""
    params = []
    for i in range(len(layer_sizes) - 1):
        fan_in, fan_out = int(layer_sizes[i]), int(layer_sizes[i + 1])
        key, kw, kb = jax.random.split(key, 3)
        bound = 1.0 / jnp.sqrt(jnp.float32(fan_in))
        w_t = jax.random.uniform(kw, (fan_in, fan_out), jnp.float32,
                                 minval=-bound, maxval=bound)
        b = jax.random.uniform(kb, (fan_out,), jnp.float32,
                               minval=-bound, maxval=bound)
        params.append((w_t, b))
    return params


def _choose_batch_tile(B, block_b):
    """Balanced batch tile: big (amortizes ~0.35us/step pipeline overhead),
    tail-balanced, and >= 2 grid steps when possible (v7x has 2 TensorCores)."""
    if B <= 8:
        return B, 1                      # single full-dim tile, no padding
    n_tiles = max(2, _cdiv(B, block_b))  # >= 2 steps for megacore sharding
    tm = min(_round_up(_cdiv(B, n_tiles), 8), _round_up(B, 8))
    return tm, _cdiv(B, tm)


def mlp_forward(x, params, *, final_relu=False, normalized_feat=False,
                block_b=512, use_bf16=False):
    """Fused MLP forward matching MLP.forward semantics.

    x: (B, in_features) f32; params: list of (W_t (in,out), b (out,))."""
    num_layers = len(params)
    final_relu_layer = num_layers if final_relu else num_layers - 1
    relu_flags = tuple(i < final_relu_layer for i in range(num_layers))

    B, K0 = x.shape
    N_out = int(params[-1][0].shape[1])

    TM, n_tiles = _choose_batch_tile(B, block_b)
    B_pad = TM * n_tiles
    x_in = x if B_pad == B else jnp.pad(x, ((0, B_pad - B), (0, 0)))

    # Weights/biases at true shapes (no feature padding); optional bf16 weights.
    w_dtype = jnp.bfloat16 if use_bf16 else jnp.float32
    flat_wb = []
    wb_shapes = []
    for w, b in params:
        flat_wb.append(w.astype(w_dtype))
        flat_wb.append(b.reshape(1, -1).astype(jnp.float32))
        wb_shapes.append((int(w.shape[0]), int(w.shape[1])))
        wb_shapes.append((1, int(b.shape[0])))

    # Rough VMEM budget: double-buffered x/out tiles + 1x weights/biases +
    # activation headroom; clamp so the request is valid on v5e/v6e/v7x.
    feat_dims = [K0] + [int(w.shape[1]) for (w, _) in params]
    act_bytes = 2 * TM * (K0 + N_out) * 4
    w_bytes = sum(int(w.size) * (2 if use_bf16 else 4) + int(b.size) * 4
                  for w, b in params)
    hidden_bytes = 4 * TM * max(feat_dims) * 4
    vmem_limit = int(min(max(2 * (act_bytes + w_bytes + hidden_bytes), 32 << 20),
                         48 << 20))

    kernel = functools.partial(_mlp_kernel,
                               num_layers=num_layers,
                               relu_flags=relu_flags,
                               normalize=normalized_feat,
                               use_bf16=use_bf16)

    def _const_spec(shape, single_buffer):
        # Grid-invariant operand: stays VMEM-resident across all batch tiles.
        if single_buffer:
            return pl.BlockSpec(shape, lambda i: (0,) * len(shape),
                                pipeline_mode=pl.Buffered(1))
        return pl.BlockSpec(shape, lambda i: (0,) * len(shape))

    def _call(single_buffer_weights):
        in_specs = [pl.BlockSpec((TM, K0), lambda i: (i, 0))]
        for s in wb_shapes:
            in_specs.append(_const_spec(s, single_buffer_weights))
        return pl.pallas_call(
            kernel,
            out_shape=jax.ShapeDtypeStruct((B_pad, N_out), x.dtype),
            grid=(n_tiles,),
            in_specs=in_specs,
            out_specs=pl.BlockSpec((TM, N_out), lambda i: (i, 0)),
            compiler_params=pltpu.CompilerParams(
                dimension_semantics=("parallel",),   # megacore-shardable (v7x)
                vmem_limit_bytes=vmem_limit),
        )(x_in, *flat_wb)

    try:
        out_p = _call(True)
    except Exception:
        # Fallback if this Pallas build rejects single-buffered grid-invariant
        # inputs; only costs extra weight VMEM (harmless at these sizes).
        out_p = _call(False)

    return out_p if B_pad == B else out_p[:B]


def _reference_forward(x, params, *, final_relu=False, normalized_feat=False):
    num_layers = len(params)
    final_relu_layer = num_layers if final_relu else num_layers - 1
    for i, (w_t, b) in enumerate(params):
        if i < final_relu_layer:
            x = jnp.maximum(x, 0.0)
        x = x @ w_t + b
    if normalized_feat:
        n = jnp.sqrt(jnp.sum(x * x, axis=1, keepdims=True))
        x = x / jnp.maximum(n, 1e-12)
    return x


if __name__ == "__main__":
    key = jax.random.PRNGKey(0)
    layer_sizes = [32, 64, 48, 16]
    kx1, kp, kx2, kx3 = jax.random.split(key, 4)
    params = init_mlp_params(kp, layer_sizes)

    # Case 1: tiny batch (single full-dim tile), normalized features.
    x1 = jax.random.normal(kx1, (8, layer_sizes[0]), jnp.float32)
    out1 = jax.block_until_ready(
        mlp_forward(x1, params, final_relu=False, normalized_feat=True))
    ref1 = _reference_forward(x1, params, final_relu=False, normalized_feat=True)
    assert out1.shape == (8, layer_sizes[-1])
    assert jnp.allclose(out1, ref1, atol=1e-5, rtol=1e-5)

    # Case 2: batch that doesn't divide the tile -> balanced 2-step "parallel"
    # grid with a padded batch tail; final ReLU, no normalize.
    x2 = jax.random.normal(kx2, (200, layer_sizes[0]), jnp.float32)
    out2 = jax.block_until_ready(
        mlp_forward(x2, params, final_relu=True, normalized_feat=False))
    ref2 = _reference_forward(x2, params, final_relu=True, normalized_feat=False)
    assert out2.shape == (200, layer_sizes[-1])
    assert jnp.allclose(out2, ref2, atol=1e-5, rtol=1e-5)

    # Case 3: bf16 MXU path (f32 accumulation), normalized output.
    x3 = jax.random.normal(kx3, (256, layer_sizes[0]), jnp.float32)
    out3 = jax.block_until_ready(
        mlp_forward(x3, params, normalized_feat=True, use_bf16=True))
    ref3 = _reference_forward(x3, params, normalized_feat=True)
    assert out3.shape == (256, layer_sizes[-1])
    assert jnp.allclose(out3, ref3, atol=5e-2, rtol=5e-2)

    print("KERNEL_OK")
</pallas_src>

<mosaic_0001>
module attributes {stable_mosaic.version = 11 : i64} {
  func.func @_mlp_kernel(%arg0: i32, %arg1: memref<8x32xf32, #tpu.memory_space<vmem>>, %arg2: memref<32x64xf32, #tpu.memory_space<vmem>>, %arg3: memref<1x64xf32, #tpu.memory_space<vmem>>, %arg4: memref<64x48xf32, #tpu.memory_space<vmem>>, %arg5: memref<1x48xf32, #tpu.memory_space<vmem>>, %arg6: memref<48x16xf32, #tpu.memory_space<vmem>>, %arg7: memref<1x16xf32, #tpu.memory_space<vmem>>, %arg8: memref<8x16xf32, #tpu.memory_space<vmem>>) attributes {dimension_semantics = [#tpu.dimension_semantics<parallel>], iteration_bounds = array<i64: 1>, scalar_prefetch = 0 : i64, scratch_operands = 0 : i64, tpu.core_type = #tpu.core_type<tc>, window_params = [{transform_indices = @transform_0, window_bounds = array<i64: 8, 32>}, {pipeline_mode = #tpu.pipeline_mode<synchronous>, transform_indices = @transform_1, window_bounds = array<i64: 32, 64>}, {pipeline_mode = #tpu.pipeline_mode<synchronous>, transform_indices = @transform_2, window_bounds = array<i64: 1, 64>}, {pipeline_mode = #tpu.pipeline_mode<synchronous>, transform_indices = @transform_3, window_bounds = array<i64: 64, 48>}, {pipeline_mode = #tpu.pipeline_mode<synchronous>, transform_indices = @transform_4, window_bounds = array<i64: 1, 48>}, {pipeline_mode = #tpu.pipeline_mode<synchronous>, transform_indices = @transform_5, window_bounds = array<i64: 48, 16>}, {pipeline_mode = #tpu.pipeline_mode<synchronous>, transform_indices = @transform_6, window_bounds = array<i64: 1, 16>}, {transform_indices = @transform_7, window_bounds = array<i64: 8, 16>}]} {
    %c0 = arith.constant 0 : index
    %c0_0 = arith.constant 0 : index
    %0 = vector.load %arg1[%c0, %c0_0] : memref<8x32xf32, #tpu.memory_space<vmem>>, vector<8x32xf32>
    %cst = arith.constant 0.000000e+00 : f32
    %1 = vector.broadcast %cst : f32 to vector<8x32xf32>
    %2 = arith.maximumf %0, %1 : vector<8x32xf32>
    %c0_1 = arith.constant 0 : index
    %c0_2 = arith.constant 0 : index
    %3 = vector.load %arg2[%c0_1, %c0_2] : memref<32x64xf32, #tpu.memory_space<vmem>>, vector<32x64xf32>
    %cst_3 = arith.constant dense<0.000000e+00> : vector<8x64xf32>
    %4 = tpu.matmul %2, %3, %cst_3 {dimension_numbers = #tpu.dot_dimension_numbers<[1], [0], [0], [1], [0, 0, 1, 1], [], []>} : vector<8x32xf32>, vector<32x64xf32>, vector<8x64xf32> -> vector<8x64xf32>
    %c0_4 = arith.constant 0 : index
    %c0_5 = arith.constant 0 : index
    %5 = vector.load %arg3[%c0_4, %c0_5] : memref<1x64xf32, #tpu.memory_space<vmem>>, vector<1x64xf32>
    %6 = vector.broadcast %5 : vector<1x64xf32> to vector<8x64xf32>
    %7 = arith.addf %4, %6 : vector<8x64xf32>
    %cst_6 = arith.constant 0.000000e+00 : f32
    %8 = vector.broadcast %cst_6 : f32 to vector<8x64xf32>
    %9 = arith.maximumf %7, %8 : vector<8x64xf32>
    %c0_7 = arith.constant 0 : index
    %c0_8 = arith.constant 0 : index
    %10 = vector.load %arg4[%c0_7, %c0_8] : memref<64x48xf32, #tpu.memory_space<vmem>>, vector<64x48xf32>
    %cst_9 = arith.constant dense<0.000000e+00> : vector<8x48xf32>
    %11 = tpu.matmul %9, %10, %cst_9 {dimension_numbers = #tpu.dot_dimension_numbers<[1], [0], [0], [1], [0, 0, 1, 1], [], []>} : vector<8x64xf32>, vector<64x48xf32>, vector<8x48xf32> -> vector<8x48xf32>
    %c0_10 = arith.constant 0 : index
    %c0_11 = arith.constant 0 : index
    %12 = vector.load %arg5[%c0_10, %c0_11] : memref<1x48xf32, #tpu.memory_space<vmem>>, vector<1x48xf32>
    %13 = vector.broadcast %12 : vector<1x48xf32> to vector<8x48xf32>
    %14 = arith.addf %11, %13 : vector<8x48xf32>
    %c0_12 = arith.constant 0 : index
    %c0_13 = arith.constant 0 : index
    %15 = vector.load %arg6[%c0_12, %c0_13] : memref<48x16xf32, #tpu.memory_space<vmem>>, vector<48x16xf32>
    %cst_14 = arith.constant dense<0.000000e+00> : vector<8x16xf32>
    %16 = tpu.matmul %14, %15, %cst_14 {dimension_numbers = #tpu.dot_dimension_numbers<[1], [0], [0], [1], [0, 0, 1, 1], [], []>} : vector<8x48xf32>, vector<48x16xf32>, vector<8x16xf32> -> vector<8x16xf32>
    %c0_15 = arith.constant 0 : index
    %c0_16 = arith.constant 0 : index
    %17 = vector.load %arg7[%c0_15, %c0_16] : memref<1x16xf32, #tpu.memory_space<vmem>>, vector<1x16xf32>
    %18 = vector.broadcast %17 : vector<1x16xf32> to vector<8x16xf32>
    %19 = arith.addf %16, %18 : vector<8x16xf32>
    %20 = arith.mulf %19, %19 : vector<8x16xf32>
    %cst_17 = arith.constant dense<0.000000e+00> : vector<8xf32>
    %21 = vector.multi_reduction <add>, %20, %cst_17 [1] : vector<8x16xf32> to vector<8xf32>
    %22 = vector.shape_cast %21 : vector<8xf32> to vector<8x1xf32>
    %cst_18 = arith.constant 1.000000e-24 : f32
    %23 = vector.broadcast %cst_18 : f32 to vector<8x1xf32>
    %24 = arith.maximumf %22, %23 : vector<8x1xf32>
    %25 = math.rsqrt %24 : vector<8x1xf32>
    %26 = vector.broadcast %25 : vector<8x1xf32> to vector<8x16xf32>
    %27 = arith.mulf %19, %26 : vector<8x16xf32>
    %c0_19 = arith.constant 0 : index
    %c0_20 = arith.constant 0 : index
    %28 = vector.load %arg8[%c0_19, %c0_20] : memref<8x16xf32, #tpu.memory_space<vmem>>, vector<8x16xf32>
    tpu.vector_store %arg8[%c0_19, %c0_20], %27 {strides = array<i32>} : memref<8x16xf32, #tpu.memory_space<vmem>>, vector<8x16xf32>,
    return
  }
  func.func @transform_0(%arg0: i32) -> (i32, i32) {
    %c0_i32 = arith.constant 0 : i32
    %c0_i32_0 = arith.constant 0 : i32
    return %arg0, %c0_i32 : i32, i32
  }
  func.func @transform_1(%arg0: i32) -> (i32, i32) {
    %c0_i32 = arith.constant 0 : i32
    %c0_i32_0 = arith.constant 0 : i32
    %c0_i32_1 = arith.constant 0 : i32
    return %c0_i32, %c0_i32_0 : i32, i32
  }
  func.func @transform_2(%arg0: i32) -> (i32, i32) {
    %c0_i32 = arith.constant 0 : i32
    %c0_i32_0 = arith.constant 0 : i32
    %c0_i32_1 = arith.constant 0 : i32
    return %c0_i32, %c0_i32_0 : i32, i32
  }
  func.func @transform_3(%arg0: i32) -> (i32, i32) {
    %c0_i32 = arith.constant 0 : i32
    %c0_i32_0 = arith.constant 0 : i32
    %c0_i32_1 = arith.constant 0 : i32
    return %c0_i32, %c0_i32_0 : i32, i32
  }
  func.func @transform_4(%arg0: i32) -> (i32, i32) {
    %c0_i32 = arith.constant 0 : i32
    %c0_i32_0 = arith.constant 0 : i32
    %c0_i32_1 = arith.constant 0 : i32
    return %c0_i32, %c0_i32_0 : i32, i32
  }
  func.func @transform_5(%arg0: i32) -> (i32, i32) {
    %c0_i32 = arith.constant 0 : i32
    %c0_i32_0 = arith.constant 0 : i32
    %c0_i32_1 = arith.constant 0 : i32
    return %c0_i32, %c0_i32_0 : i32, i32
  }
  func.func @transform_6(%arg0: i32) -> (i32, i32) {
    %c0_i32 = arith.constant 0 : i32
    %c0_i32_0 = arith.constant 0 : i32
    %c0_i32_1 = arith.constant 0 : i32
    return %c0_i32, %c0_i32_0 : i32, i32
  }
  func.func @transform_7(%arg0: i32) -> (i32, i32) {
    %c0_i32 = arith.constant 0 : i32
    %c0_i32_0 = arith.constant 0 : i32
    return %arg0, %c0_i32 : i32, i32
  }
}

module attributes {stable_mosaic.version = 11 : i64} {
  func.func @_mlp_kernel(%arg0: i32, %arg1: memref<8x32xf32, #tpu.memory_space<vmem>>, %arg2: memref<32x64xf32, #tpu.memory_space<vmem>>, %arg3: memref<1x64xf32, #tpu.memory_space<vmem>>, %arg4: memref<64x48xf32, #tpu.memory_space<vmem>>, %arg5: memref<1x48xf32, #tpu.memory_space<vmem>>, %arg6: memref<48x16xf32, #tpu.memory_space<vmem>>, %arg7: memref<1x16xf32, #tpu.memory_space<vmem>>, %arg8: memref<8x16xf32, #tpu.memory_space<vmem>>) attributes {dimension_semantics = [#tpu.dimension_semantics<parallel>], iteration_bounds = array<i64: 1>, scalar_prefetch = 0 : i64, scratch_operands = 0 : i64, tpu.core_type = #tpu.core_type<tc>, window_params = [{transform_indices = @transform_0, window_bounds = array<i64: 8, 32>}, {pipeline_mode = #tpu.pipeline_mode<synchronous>, transform_indices = @transform_1, window_bounds = array<i64: 32, 64>}, {pipeline_mode = #tpu.pipeline_mode<synchronous>, transform_indices = @transform_2, window_bounds = array<i64: 1, 64>}, {pipeline_mode = #tpu.pipeline_mode<synchronous>, transform_indices = @transform_3, window_bounds = array<i64: 64, 48>}, {pipeline_mode = #tpu.pipeline_mode<synchronous>, transform_indices = @transform_4, window_bounds = array<i64: 1, 48>}, {pipeline_mode = #tpu.pipeline_mode<synchronous>, transform_indices = @transform_5, window_bounds = array<i64: 48, 16>}, {pipeline_mode = #tpu.pipeline_mode<synchronous>, transform_indices = @transform_6, window_bounds = array<i64: 1, 16>}, {transform_indices = @transform_7, window_bounds = array<i64: 8, 16>}]} {
    %c0 = arith.constant 0 : index
    %c0_0 = arith.constant 0 : index
    %0 = vector.load %arg1[%c0, %c0_0] : memref<8x32xf32, #tpu.memory_space<vmem>>, vector<8x32xf32>
    %cst = arith.constant 0.000000e+00 : f32
    %1 = vector.broadcast %cst : f32 to vector<8x32xf32>
    %2 = arith.maximumf %0, %1 : vector<8x32xf32>
    %c0_1 = arith.constant 0 : index
    %c0_2 = arith.constant 0 : index
    %3 = vector.load %arg2[%c0_1, %c0_2] : memref<32x64xf32, #tpu.memory_space<vmem>>, vector<32x64xf32>
    %cst_3 = arith.constant dense<0.000000e+00> : vector<8x64xf32>
    %4 = tpu.matmul %2, %3, %cst_3 {dimension_numbers = #tpu.dot_dimension_numbers<[1], [0], [0], [1], [0, 0, 1, 1], [], []>} : vector<8x32xf32>, vector<32x64xf32>, vector<8x64xf32> -> vector<8x64xf32>
    %c0_4 = arith.constant 0 : index
    %c0_5 = arith.constant 0 : index
    %5 = vector.load %arg3[%c0_4, %c0_5] : memref<1x64xf32, #tpu.memory_space<vmem>>, vector<1x64xf32>
    %6 = vector.broadcast %5 : vector<1x64xf32> to vector<8x64xf32>
    %7 = arith.addf %4, %6 : vector<8x64xf32>
    %cst_6 = arith.constant 0.000000e+00 : f32
    %8 = vector.broadcast %cst_6 : f32 to vector<8x64xf32>
    %9 = arith.maximumf %7, %8 : vector<8x64xf32>
    %c0_7 = arith.constant 0 : index
    %c0_8 = arith.constant 0 : index
    %10 = vector.load %arg4[%c0_7, %c0_8] : memref<64x48xf32, #tpu.memory_space<vmem>>, vector<64x48xf32>
    %cst_9 = arith.constant dense<0.000000e+00> : vector<8x48xf32>
    %11 = tpu.matmul %9, %10, %cst_9 {dimension_numbers = #tpu.dot_dimension_numbers<[1], [0], [0], [1], [0, 0, 1, 1], [], []>} : vector<8x64xf32>, vector<64x48xf32>, vector<8x48xf32> -> vector<8x48xf32>
    %c0_10 = arith.constant 0 : index
    %c0_11 = arith.constant 0 : index
    %12 = vector.load %arg5[%c0_10, %c0_11] : memref<1x48xf32, #tpu.memory_space<vmem>>, vector<1x48xf32>
    %13 = vector.broadcast %12 : vector<1x48xf32> to vector<8x48xf32>
    %14 = arith.addf %11, %13 : vector<8x48xf32>
    %c0_12 = arith.constant 0 : index
    %c0_13 = arith.constant 0 : index
    %15 = vector.load %arg6[%c0_12, %c0_13] : memref<48x16xf32, #tpu.memory_space<vmem>>, vector<48x16xf32>
    %cst_14 = arith.constant dense<0.000000e+00> : vector<8x16xf32>
    %16 = tpu.matmul %14, %15, %cst_14 {dimension_numbers = #tpu.dot_dimension_numbers<[1], [0], [0], [1], [0, 0, 1, 1], [], []>} : vector<8x48xf32>, vector<48x16xf32>, vector<8x16xf32> -> vector<8x16xf32>
    %c0_15 = arith.constant 0 : index
    %c0_16 = arith.constant 0 : index
    %17 = vector.load %arg7[%c0_15, %c0_16] : memref<1x16xf32, #tpu.memory_space<vmem>>, vector<1x16xf32>
    %18 = vector.broadcast %17 : vector<1x16xf32> to vector<8x16xf32>
    %19 = arith.addf %16, %18 : vector<8x16xf32>
    %20 = arith.mulf %19, %19 : vector<8x16xf32>
    %cst_17 = arith.constant dense<0.000000e+00> : vector<8xf32>
    %21 = vector.multi_reduction <add>, %20, %cst_17 [1] : vector<8x16xf32> to vector<8xf32>
    %22 = vector.shape_cast %21 : vector<8xf32> to vector<8x1xf32>
    %cst_18 = arith.constant 1.000000e-24 : f32
    %23 = vector.broadcast %cst_18 : f32 to vector<8x1xf32>
    %24 = arith.maximumf %22, %23 : vector<8x1xf32>
    %25 = math.rsqrt %24 : vector<8x1xf32>
    %26 = vector.broadcast %25 : vector<8x1xf32> to vector<8x16xf32>
    %27 = arith.mulf %19, %26 : vector<8x16xf32>
    %c0_19 = arith.constant 0 : index
    %c0_20 = arith.constant 0 : index
    %28 = vector.load %arg8[%c0_19, %c0_20] : memref<8x16xf32, #tpu.memory_space<vmem>>, vector<8x16xf32>
    tpu.vector_store %arg8[%c0_19, %c0_20], %27 {strides = array<i32>} : memref<8x16xf32, #tpu.memory_space<vmem>>, vector<8x16xf32>,
    return
  }
  func.func @transform_0(%arg0: i32) -> (i32, i32) {
    %c0_i32 = arith.constant 0 : i32
    %c0_i32_0 = arith.constant 0 : i32
    return %arg0, %c0_i32 : i32, i32
  }
  func.func @transform_1(%arg0: i32) -> (i32, i32) {
    %c0_i32 = arith.constant 0 : i32
    %c0_i32_0 = arith.constant 0 : i32
    %c0_i32_1 = arith.constant 0 : i32
    return %c0_i32, %c0_i32_0 : i32, i32
  }
  func.func @transform_2(%arg0: i32) -> (i32, i32) {
    %c0_i32 = arith.constant 0 : i32
    %c0_i32_0 = arith.constant 0 : i32
    %c0_i32_1 = arith.constant 0 : i32
    return %c0_i32, %c0_i32_0 : i32, i32
  }
  func.func @transform_3(%arg0: i32) -> (i32, i32) {
    %c0_i32 = arith.constant 0 : i32
    %c0_i32_0 = arith.constant 0 : i32
    %c0_i32_1 = arith.constant 0 : i32
    return %c0_i32, %c0_i32_0 : i32, i32
  }
  func.func @transform_4(%arg0: i32) -> (i32, i32) {
    %c0_i32 = arith.constant 0 : i32
    %c0_i32_0 = arith.constant 0 : i32
    %c0_i32_1 = arith.constant 0 : i32
    return %c0_i32, %c0_i32_0 : i32, i32
  }
  func.func @transform_5(%arg0: i32) -> (i32, i32) {
    %c0_i32 = arith.constant 0 : i32
    %c0_i32_0 = arith.constant 0 : i32
    %c0_i32_1 = arith.constant 0 : i32
    return %c0_i32, %c0_i32_0 : i32, i32
  }
  func.func @transform_6(%arg0: i32) -> (i32, i32) {
    %c0_i32 = arith.constant 0 : i32
    %c0_i32_0 = arith.constant 0 : i32
    %c0_i32_1 = arith.constant 0 : i32
    return %c0_i32, %c0_i32_0 : i32, i32
  }
  func.func @transform_7(%arg0: i32) -> (i32, i32) {
    %c0_i32 = arith.constant 0 : i32
    %c0_i32_0 = arith.constant 0 : i32
    return %arg0, %c0_i32 : i32, i32
  }
}

</mosaic_0001>

<llo_original>
// kernel: tpu_custom_call.1
$region0: #{tpu_custom_call.1}
  #allocation0 [shape = 'u32[]', space=smem, size = 0x4, offset = 0x4, fixed_abs, tag = 'smem constant byte address 0x4 - core index']
  #allocation1 [shape = 'u32[144,128]{1,0:T(1,128)}', space=vmem, size = 0x12000, scoped, tag = 'internal scratch']
  %s0 = inlined_call_operand.vmem [shape: f32[8,32], index: 0, kind: input, shape index: {}]
  %s1 = inlined_call_operand.vmem [shape: f32[32,64], index: 1, kind: input, shape index: {}]
  %s2 = inlined_call_operand.vmem [shape: f32[1,64], index: 2, kind: input, shape index: {}]
  %s3 = inlined_call_operand.vmem [shape: f32[64,48], index: 3, kind: input, shape index: {}]
  %s4 = inlined_call_operand.vmem [shape: f32[1,48], index: 4, kind: input, shape index: {}]
  %s5 = inlined_call_operand.vmem [shape: f32[48,16], index: 5, kind: input, shape index: {}]
  %s6 = inlined_call_operand.vmem [shape: f32[1,16], index: 6, kind: input, shape index: {}]
  %s7 = inlined_call_operand.hbm [shape: f32[8,16], index: 7, kind: output, shape index: {}]
  %s8 = sld [smem:[#allocation0]]
  $region38: #{tpu_custom_call.1} parent=0
    _
  %s10 = ssub.s32 1, %s8
  %s11 = scalar_select 0, %s10, %s8
  $region1: #{tpu_custom_call.1} parent=0
    #allocation2 [shape = 'u8[4096]{0}', space=vmem, size = 0x1000, scoped, tag = 'output window, operand 0, single buffered']
    #allocation3 [shape = 's32[1]{0}', space=sflag, size = 0x4, scoped, tag = 'scoped memory for tpu_custom_call.1']
    %12 = vsyncpa [#allocation3], 0
    // Predicated region
    $region2: #{tpu_custom_call.1} parent=1 // pred_check
      _
    $region3: #{tpu_custom_call.1} parent=1 // pred_check_branch
      %14 = sbr.rel (0) target = $region5
    $region4: #{tpu_custom_call.1} parent=1 // pred_region
      _
    $region5: #{tpu_custom_call.1} parent=1 // pred_fallthru
      _
    // Predicated region
    $region6: #{tpu_custom_call.1} parent=1 // pred_check
      _
    $region7: #{tpu_custom_call.1} parent=1 // pred_check_branch
      %16 = sbr.rel (0) target = $region9
    $region8: #{tpu_custom_call.1} parent=1 // pred_region
      _
    $region9: #{tpu_custom_call.1} parent=1 // pred_fallthru
      _
    // Predicated region
    $region10: #{tpu_custom_call.1} parent=1 // pred_check
      _
    $region11: #{tpu_custom_call.1} parent=1 // pred_check_branch
      %18 = sbr.rel (0) target = $region13
    $region12: #{tpu_custom_call.1} parent=1 // pred_region
      _
    $region13: #{tpu_custom_call.1} parent=1 // pred_fallthru
      _
    // Predicated region
    $region14: #{tpu_custom_call.1} parent=1 // pred_check
      _
    $region15: #{tpu_custom_call.1} parent=1 // pred_check_branch
      %20 = sbr.rel (0) target = $region17
    $region16: #{tpu_custom_call.1} parent=1 // pred_region
      _
    $region17: #{tpu_custom_call.1} parent=1 // pred_fallthru
      _
    // Predicated region
    $region18: #{tpu_custom_call.1} parent=1 // pred_check
      _
    $region19: #{tpu_custom_call.1} parent=1 // pred_check_branch
      %22 = sbr.rel (0) target = $region21
    $region20: #{tpu_custom_call.1} parent=1 // pred_region
      _
    $region21: #{tpu_custom_call.1} parent=1 // pred_fallthru
      _
    // Predicated region
    $region22: #{tpu_custom_call.1} parent=1 // pred_check
      _
    $region23: #{tpu_custom_call.1} parent=1 // pred_check_branch
      %24 = sbr.rel (0) target = $region25
    $region24: #{tpu_custom_call.1} parent=1 // pred_region
      _
    $region25: #{tpu_custom_call.1} parent=1 // pred_fallthru
      _
    // Predicated region
    $region26: #{tpu_custom_call.1} parent=1 // pred_check
      _
    $region27: #{tpu_custom_call.1} parent=1 // pred_check_branch
      %26 = sbr.rel (0) target = $region29
    $region28: #{tpu_custom_call.1} parent=1 // pred_region
      _
    $region29: #{tpu_custom_call.1} parent=1 // pred_fallthru
      _
    %v27 = vld [vmem:[%s0] sm:$0xff]
    %v28 = vmax.f32 %v27, 0.0
    %v29 = vld [vmem:[%s1] sm:$0xff]
    %v30 = vld [vmem:[%s1 + $0x8] sm:$0xff]
    %v31 = vld [vmem:[%s1 + $0x10] sm:$0xff]
    %v32 = vld [vmem:[%s1 + $0x18] sm:$0xff]
    %v33 = vld [vmem:[%s2] sm:$0x1]
    %v35 = vlaneseq
    %v36 = vshrl.u32 %v35, 7
    %v37 = vsub.s32 0, %v36
    %v38 = vrot.slane %v33, %v37
    %vm40 = vcmask 261120
    %v42 = vsel %vm40, %v28, 0
    %44 = vmatprep.subr.mxu0 0.0
    %45 = vmatpush1.msra.mxu0 %v29
    %46 = vmatprep.subr.mxu0 0.0
    %47 = vmatpush1.msra.mxu0 %v30
    %48 = vmatprep.subr.mxu0 0.0
    %49 = vmatpush1.msra.mxu0 %v31
    %50 = vmatprep.subr.mxu0 0.0
    %51 = vmatpush1.msra.mxu0 %v32
    %52 = vmatprep.subr.mxu0 0.0
    %53 = vmatpush1.msra.mxu0 0.0
    %54 = vmatprep.subr.mxu0 0.0
    %55 = vmatpush1.msra.mxu0 0.0
    %56 = vmatprep.subr.mxu0 0.0
    %57 = vmatpush1.msra.mxu0 0.0
    %58 = vmatprep.subr.mxu0 0.0
    %59 = vmatpush1.msra.mxu0 0.0
    %60 = vmatprep.subr.mxu0 0.0
    %61 = vmatpush1.msra.mxu0 0.0
    %62 = vmatprep.subr.mxu0 0.0
    %63 = vmatpush1.msra.mxu0 0.0
    %64 = vmatprep.subr.mxu0 0.0
    %65 = vmatpush1.msra.mxu0 0.0
    %66 = vmatprep.subr.mxu0 0.0
    %67 = vmatpush1.msra.mxu0 0.0
    %68 = vmatprep.subr.mxu0 0.0
    %69 = vmatpush1.msra.mxu0 0.0
    %70 = vmatprep.subr.mxu0 0.0
    %71 = vmatpush1.msra.mxu0 0.0
    %72 = vmatprep.subr.mxu0 0.0
    %73 = vmatpush1.msra.mxu0 0.0
    %74 = vmatprep.subr.mxu0 0.0
    %75 = vmatpush1.msra.mxu0 0.0
    %76 = vmatprep.subr.mxu0 0.0
    %77 = vmatpush1.msra.mxu0 0.0
    %78 = vmatprep.subr.mxu0 0.0
    %79 = vmatpush1.msra.mxu0 0.0
    %80 = vmatprep.subr.mxu0 0.0
    %81 = vmatpush1.msra.mxu0 0.0
    %82 = vmatprep.subr.mxu0 0.0
    %83 = vmatpush1.msra.mxu0 0.0
    %84 = vmatprep.subr.mxu0 0.0
    %85 = vmatpush1.msra.mxu0 0.0
    %86 = vmatprep.subr.mxu0 0.0
    %87 = vmatpush1.msra.mxu0 0.0
    %88 = vmatprep.subr.mxu0 0.0
    %89 = vmatpush1.msra.mxu0 0.0
    %90 = vmatprep.subr.mxu0 0.0
    %91 = vmatpush1.msra.mxu0 0.0
    %92 = vmatprep.subr.mxu0 0.0
    %93 = vmatpush1.msra.mxu0 0.0
    %94 = vmatprep.subr.mxu0 0.0
    %95 = vmatpush1.msra.mxu0 0.0
    %96 = vmatprep.subr.mxu0 0.0
    %97 = vmatpush1.msra.mxu0 0.0
    %98 = vmatprep.subr.mxu0 0.0
    %99 = vmatpush1.msra.mxu0 0.0
    %100 = vmatprep.subr.mxu0 0.0
    %101 = vmatpush1.msra.mxu0 0.0
    %102 = vmatprep.subr.mxu0 0.0
    %103 = vmatpush1.msra.mxu0 0.0
    %104 = vmatprep.subr.mxu0 0.0
    %105 = vmatpush1.msra.mxu0 0.0
    %106 = vmatprep.subr.mxu0 0.0
    %107 = vmatpush1.msra.mxu0 0.0
    %108 = vmatprep.mubr.f32.mxu0 0.0
    %109 = vmatmul.mubr.f32.gmra.mrb[0].mxu0 %v42
    %v110 = vpop.f32.mrb[0].mxu0
    %v111 = vadd.f32 %v38, %v110
    %v112 = vpop.f32.mrb[0].mxu0
    %113 = vdwg.mxu0
    %v114 = vmax.f32 %v111, 0.0
    %v115 = vld [vmem:[%s3] sm:$0xff]
    %v116 = vld [vmem:[%s3 + $0x8] sm:$0xff]
    %v117 = vld [vmem:[%s3 + $0x10] sm:$0xff]
    %v118 = vld [vmem:[%s3 + $0x18] sm:$0xff]
    %v119 = vld [vmem:[%s3 + $0x20] sm:$0xff]
    %v120 = vld [vmem:[%s3 + $0x28] sm:$0xff]
    %v121 = vld [vmem:[%s3 + $0x30] sm:$0xff]
    %v122 = vld [vmem:[%s3 + $0x38] sm:$0xff]
    %v123 = vld [vmem:[%s4] sm:$0x1]
    %v125 = vlaneseq
    %v126 = vshrl.u32 %v125, 7
    %v127 = vsub.s32 0, %v126
    %v128 = vrot.slane %v123, %v127
    %vm130 = vcmask 523264
    %v132 = vsel %vm130, %v114, 0
    %134 = vmatprep.subr.mxu0 0.0
    %135 = vmatpush1.msra.mxu0 %v115
    %136 = vmatprep.subr.mxu0 0.0
    %137 = vmatpush1.msra.mxu0 %v116
    %138 = vmatprep.subr.mxu0 0.0
    %139 = vmatpush1.msra.mxu0 %v117
    %140 = vmatprep.subr.mxu0 0.0
    %141 = vmatpush1.msra.mxu0 %v118
    %142 = vmatprep.subr.mxu0 0.0
    %143 = vmatpush1.msra.mxu0 %v119
    %144 = vmatprep.subr.mxu0 0.0
    %145 = vmatpush1.msra.mxu0 %v120
    %146 = vmatprep.subr.mxu0 0.0
    %147 = vmatpush1.msra.mxu0 %v121
    %148 = vmatprep.subr.mxu0 0.0
    %149 = vmatpush1.msra.mxu0 %v122
    %150 = vmatprep.subr.mxu0 0.0
    %151 = vmatpush1.msra.mxu0 0.0
    %152 = vmatprep.subr.mxu0 0.0
    %153 = vmatpush1.msra.mxu0 0.0
    %154 = vmatprep.subr.mxu0 0.0
    %155 = vmatpush1.msra.mxu0 0.0
    %156 = vmatprep.subr.mxu0 0.0
    %157 = vmatpush1.msra.mxu0 0.0
    %158 = vmatprep.subr.mxu0 0.0
    %159 = vmatpush1.msra.mxu0 0.0
    %160 = vmatprep.subr.mxu0 0.0
    %161 = vmatpush1.msra.mxu0 0.0
    %162 = vmatprep.subr.mxu0 0.0
    %163 = vmatpush1.msra.mxu0 0.0
    %164 = vmatprep.subr.mxu0 0.0
    %165 = vmatpush1.msra.mxu0 0.0
    %166 = vmatprep.subr.mxu0 0.0
    %167 = vmatpush1.msra.mxu0 0.0
    %168 = vmatprep.subr.mxu0 0.0
    %169 = vmatpush1.msra.mxu0 0.0
    %170 = vmatprep.subr.mxu0 0.0
    %171 = vmatpush1.msra.mxu0 0.0
    %172 = vmatprep.subr.mxu0 0.0
    %173 = vmatpush1.msra.mxu0 0.0
    %174 = vmatprep.subr.mxu0 0.0
    %175 = vmatpush1.msra.mxu0 0.0
    %176 = vmatprep.subr.mxu0 0.0
    %177 = vmatpush1.msra.mxu0 0.0
    %178 = vmatprep.subr.mxu0 0.0
    %179 = vmatpush1.msra.mxu0 0.0
    %180 = vmatprep.subr.mxu0 0.0
    %181 = vmatpush1.msra.mxu0 0.0
    %182 = vmatprep.subr.mxu0 0.0
    %183 = vmatpush1.msra.mxu0 0.0
    %184 = vmatprep.subr.mxu0 0.0
    %185 = vmatpush1.msra.mxu0 0.0
    %186 = vmatprep.subr.mxu0 0.0
    %187 = vmatpush1.msra.mxu0 0.0
    %188 = vmatprep.subr.mxu0 0.0
    %189 = vmatpush1.msra.mxu0 0.0
    %190 = vmatprep.subr.mxu0 0.0
    %191 = vmatpush1.msra.mxu0 0.0
    %192 = vmatprep.subr.mxu0 0.0
    %193 = vmatpush1.msra.mxu0 0.0
    %194 = vmatprep.subr.mxu0 0.0
    %195 = vmatpush1.msra.mxu0 0.0
    %196 = vmatprep.subr.mxu0 0.0
    %197 = vmatpush1.msra.mxu0 0.0
    %198 = vmatprep.mubr.f32.mxu0 0.0
    %199 = vmatmul.mubr.f32.gmra.mrb[0].mxu0 %v132
    %v200 = vpop.f32.mrb[0].mxu0
    %v201 = vadd.f32 %v128, %v200
    %v202 = vpop.f32.mrb[0].mxu0
    %203 = vdwg.mxu0
    %v204 = vld [vmem:[%s5] sm:$0xff]
    %v205 = vld [vmem:[%s5 + $0x8] sm:$0xff]
    %v206 = vld [vmem:[%s5 + $0x10] sm:$0xff]
    %v207 = vld [vmem:[%s5 + $0x18] sm:$0xff]
    %v208 = vld [vmem:[%s5 + $0x20] sm:$0xff]
    %v209 = vld [vmem:[%s5 + $0x28] sm:$0xff]
    %v210 = vld [vmem:[%s6] sm:$0x1]
    %v212 = vlaneseq
    %v213 = vshrl.u32 %v212, 7
    %v214 = vsub.s32 0, %v213
    %v215 = vrot.slane %v210, %v214
    %vm217 = vcmask 392192
    %v219 = vsel %vm217, %v201, 0
    %221 = vmatprep.subr.mxu0 0.0
    %222 = vmatpush1.msra.mxu0 %v204
    %223 = vmatprep.subr.mxu0 0.0
    %224 = vmatpush1.msra.mxu0 %v205
    %225 = vmatprep.subr.mxu0 0.0
    %226 = vmatpush1.msra.mxu0 %v206
    %227 = vmatprep.subr.mxu0 0.0
    %228 = vmatpush1.msra.mxu0 %v207
    %229 = vmatprep.subr.mxu0 0.0
    %230 = vmatpush1.msra.mxu0 %v208
    %231 = vmatprep.subr.mxu0 0.0
    %232 = vmatpush1.msra.mxu0 %v209
    %233 = vmatprep.subr.mxu0 0.0
    %234 = vmatpush1.msra.mxu0 0.0
    %235 = vmatprep.subr.mxu0 0.0
    %236 = vmatpush1.msra.mxu0 0.0
    %237 = vmatprep.subr.mxu0 0.0
    %238 = vmatpush1.msra.mxu0 0.0
    %239 = vmatprep.subr.mxu0 0.0
    %240 = vmatpush1.msra.mxu0 0.0
    %241 = vmatprep.subr.mxu0 0.0
    %242 = vmatpush1.msra.mxu0 0.0
    %243 = vmatprep.subr.mxu0 0.0
    %244 = vmatpush1.msra.mxu0 0.0
    %245 = vmatprep.subr.mxu0 0.0
    %246 = vmatpush1.msra.mxu0 0.0
    %247 = vmatprep.subr.mxu0 0.0
    %248 = vmatpush1.msra.mxu0 0.0
    %249 = vmatprep.subr.mxu0 0.0
    %250 = vmatpush1.msra.mxu0 0.0
    %251 = vmatprep.subr.mxu0 0.0
    %252 = vmatpush1.msra.mxu0 0.0
    %253 = vmatprep.subr.mxu0 0.0
    %254 = vmatpush1.msra.mxu0 0.0
    %255 = vmatprep.subr.mxu0 0.0
    %256 = vmatpush1.msra.mxu0 0.0
    %257 = vmatprep.subr.mxu0 0.0
    %258 = vmatpush1.msra.mxu0 0.0
    %259 = vmatprep.subr.mxu0 0.0
    %260 = vmatpush1.msra.mxu0 0.0
    %261 = vmatprep.subr.mxu0 0.0
    %262 = vmatpush1.msra.mxu0 0.0
    %263 = vmatprep.subr.mxu0 0.0
    %264 = vmatpush1.msra.mxu0 0.0
    %265 = vmatprep.subr.mxu0 0.0
    %266 = vmatpush1.msra.mxu0 0.0
    %267 = vmatprep.subr.mxu0 0.0
    %268 = vmatpush1.msra.mxu0 0.0
    %269 = vmatprep.subr.mxu0 0.0
    %270 = vmatpush1.msra.mxu0 0.0
    %271 = vmatprep.subr.mxu0 0.0
    %272 = vmatpush1.msra.mxu0 0.0
    %273 = vmatprep.subr.mxu0 0.0
    %274 = vmatpush1.msra.mxu0 0.0
    %275 = vmatprep.subr.mxu0 0.0
    %276 = vmatpush1.msra.mxu0 0.0
    %277 = vmatprep.subr.mxu0 0.0
    %278 = vmatpush1.msra.mxu0 0.0
    %279 = vmatprep.subr.mxu0 0.0
    %280 = vmatpush1.msra.mxu0 0.0
    %281 = vmatprep.subr.mxu0 0.0
    %282 = vmatpush1.msra.mxu0 0.0
    %283 = vmatprep.subr.mxu0 0.0
    %284 = vmatpush1.msra.mxu0 0.0
    %285 = vmatprep.mubr.f32.mxu0 0.0
    %286 = vmatmul.mubr.f32.gmra.mrb[0].mxu0 %v219
    %v287 = vpop.f32.mrb[0].mxu0
    %v288 = vadd.f32 %v215, %v287
    %v289 = vpop.f32.mrb[0].mxu0
    %290 = vdwg.mxu0
    %v291 = vmul.f32 %v288, %v288
    %vm292 = vcmask 130048
    %v293 = vsel %vm292, %v291, 0.0
    %294 = vadd.xlane.f32.xlu0 %v293
    %v295 = vpop.xlane.xlu0 %294
    %v296 = vmax.f32 %v295, 1e-24
    %v297 = vrsqrt.pop %v296
    %v298 = vmul.f32 %v288, %v297
    %299 = vst.msk [vmem:[#allocation2] sm:$0xff] %vm292, %v298
    // Predicated region
    $region30: #{tpu_custom_call.1} parent=1 // pred_check
      _
    $region31: #{tpu_custom_call.1} parent=1 // pred_check_branch
      %301 = sbr.rel (0) target = $region33
    $region32: #{tpu_custom_call.1} parent=1 // pred_region
      %s303 = ssub.s32 128, 128
      %304 = vsyncadd [#allocation3], %s303
      %s306 = sshll.u32 [#allocation2], 4
      %s307 = int_to_ptr.vmem [resolvable:$true] %s306
      %309 = dma.vmem_to_hbm [thread:$0]  %s307, 128, %s7, [#allocation3]
    $region33: #{tpu_custom_call.1} parent=1 // pred_fallthru
      _
    // Predicated region
    $region34: #{tpu_custom_call.1} parent=1 // pred_check
      _
    $region35: #{tpu_custom_call.1} parent=1 // pred_check_branch
      %311 = sbr.rel (0) target = $region37
    $region36: #{tpu_custom_call.1} parent=1 // pred_region
      %312 = dma.done [#allocation3], 128
    $region37: #{tpu_custom_call.1} parent=1 // pred_fallthru
      _
    %313 = vsyncpa [#allocation3], 1

// kernel: tpu_custom_call.1
$region0: #{tpu_custom_call.1}
  #allocation0 [shape = 'u32[]', space=smem, size = 0x4, offset = 0x4, fixed_abs, tag = 'smem constant byte address 0x4 - core index']
  #allocation1 [shape = 'u32[144,128]{1,0:T(1,128)}', space=vmem, size = 0x12000, scoped, tag = 'internal scratch']
  %s0 = inlined_call_operand.vmem [shape: f32[8,32], index: 0, kind: input, shape index: {}]
  %s1 = inlined_call_operand.vmem [shape: f32[32,64], index: 1, kind: input, shape index: {}]
  %s2 = inlined_call_operand.vmem [shape: f32[1,64], index: 2, kind: input, shape index: {}]
  %s3 = inlined_call_operand.vmem [shape: f32[64,48], index: 3, kind: input, shape index: {}]
  %s4 = inlined_call_operand.vmem [shape: f32[1,48], index: 4, kind: input, shape index: {}]
  %s5 = inlined_call_operand.vmem [shape: f32[48,16], index: 5, kind: input, shape index: {}]
  %s6 = inlined_call_operand.vmem [shape: f32[1,16], index: 6, kind: input, shape index: {}]
  %s7 = inlined_call_operand.hbm [shape: f32[8,16], index: 7, kind: output, shape index: {}]
  %s8 = sld [smem:[#allocation0]]
  $region38: #{tpu_custom_call.1} parent=0
    _
  %s10 = ssub.s32 1, %s8
  %s11 = scalar_select 0, %s10, %s8
  $region1: #{tpu_custom_call.1} parent=0
    #allocation2 [shape = 'u8[4096]{0}', space=vmem, size = 0x1000, scoped, tag = 'output window, operand 0, single buffered']
    #allocation3 [shape = 's32[1]{0}', space=sflag, size = 0x4, scoped, tag = 'scoped memory for tpu_custom_call.1']
    %12 = vsyncpa [#allocation3], 0
    // Predicated region
    $region2: #{tpu_custom_call.1} parent=1 // pred_check
      _
    $region3: #{tpu_custom_call.1} parent=1 // pred_check_branch
      %14 = sbr.rel (0) target = $region5
    $region4: #{tpu_custom_call.1} parent=1 // pred_region
      _
    $region5: #{tpu_custom_call.1} parent=1 // pred_fallthru
      _
    // Predicated region
    $region6: #{tpu_custom_call.1} parent=1 // pred_check
      _
    $region7: #{tpu_custom_call.1} parent=1 // pred_check_branch
      %16 = sbr.rel (0) target = $region9
    $region8: #{tpu_custom_call.1} parent=1 // pred_region
      _
    $region9: #{tpu_custom_call.1} parent=1 // pred_fallthru
      _
    // Predicated region
    $region10: #{tpu_custom_call.1} parent=1 // pred_check
      _
    $region11: #{tpu_custom_call.1} parent=1 // pred_check_branch
      %18 = sbr.rel (0) target = $region13
    $region12: #{tpu_custom_call.1} parent=1 // pred_region
      _
    $region13: #{tpu_custom_call.1} parent=1 // pred_fallthru
      _
    // Predicated region
    $region14: #{tpu_custom_call.1} parent=1 // pred_check
      _
    $region15: #{tpu_custom_call.1} parent=1 // pred_check_branch
      %20 = sbr.rel (0) target = $region17
    $region16: #{tpu_custom_call.1} parent=1 // pred_region
      _
    $region17: #{tpu_custom_call.1} parent=1 // pred_fallthru
      _
    // Predicated region
    $region18: #{tpu_custom_call.1} parent=1 // pred_check
      _
    $region19: #{tpu_custom_call.1} parent=1 // pred_check_branch
      %22 = sbr.rel (0) target = $region21
    $region20: #{tpu_custom_call.1} parent=1 // pred_region
      _
    $region21: #{tpu_custom_call.1} parent=1 // pred_fallthru
      _
    // Predicated region
    $region22: #{tpu_custom_call.1} parent=1 // pred_check
      _
    $region23: #{tpu_custom_call.1} parent=1 // pred_check_branch
      %24 = sbr.rel (0) target = $region25
    $region24: #{tpu_custom_call.1} parent=1 // pred_region
      _
    $region25: #{tpu_custom_call.1} parent=1 // pred_fallthru
      _
    // Predicated region
    $region26: #{tpu_custom_call.1} parent=1 // pred_check
      _
    $region27: #{tpu_custom_call.1} parent=1 // pred_check_branch
      %26 = sbr.rel (0) target = $region29
    $region28: #{tpu_custom_call.1} parent=1 // pred_region
      _
    $region29: #{tpu_custom_call.1} parent=1 // pred_fallthru
      _
    %v27 = vld [vmem:[%s0] sm:$0xff]
    %v28 = vmax.f32 %v27, 0.0
    %v29 = vld [vmem:[%s1] sm:$0xff]
    %v30 = vld [vmem:[%s1 + $0x8] sm:$0xff]
    %v31 = vld [vmem:[%s1 + $0x10] sm:$0xff]
    %v32 = vld [vmem:[%s1 + $0x18] sm:$0xff]
    %v33 = vld [vmem:[%s2] sm:$0x1]
    %v35 = vlaneseq
    %v36 = vshrl.u32 %v35, 7
    %v37 = vsub.s32 0, %v36
    %v38 = vrot.slane %v33, %v37
    %vm40 = vcmask 261120
    %v42 = vsel %vm40, %v28, 0
    %44 = vmatprep.subr.mxu0 0.0
    %45 = vmatpush1.msra.mxu0 %v29
    %46 = vmatprep.subr.mxu0 0.0
    %47 = vmatpush1.msra.mxu0 %v30
    %48 = vmatprep.subr.mxu0 0.0
    %49 = vmatpush1.msra.mxu0 %v31
    %50 = vmatprep.subr.mxu0 0.0
    %51 = vmatpush1.msra.mxu0 %v32
    %52 = vmatprep.subr.mxu0 0.0
    %53 = vmatpush1.msra.mxu0 0.0
    %54 = vmatprep.subr.mxu0 0.0
    %55 = vmatpush1.msra.mxu0 0.0
    %56 = vmatprep.subr.mxu0 0.0
    %57 = vmatpush1.msra.mxu0 0.0
    %58 = vmatprep.subr.mxu0 0.0
    %59 = vmatpush1.msra.mxu0 0.0
    %60 = vmatprep.subr.mxu0 0.0
    %61 = vmatpush1.msra.mxu0 0.0
    %62 = vmatprep.subr.mxu0 0.0
    %63 = vmatpush1.msra.mxu0 0.0
    %64 = vmatprep.subr.mxu0 0.0
    %65 = vmatpush1.msra.mxu0 0.0
    %66 = vmatprep.subr.mxu0 0.0
    %67 = vmatpush1.msra.mxu0 0.0
    %68 = vmatprep.subr.mxu0 0.0
    %69 = vmatpush1.msra.mxu0 0.0
    %70 = vmatprep.subr.mxu0 0.0
    %71 = vmatpush1.msra.mxu0 0.0
    %72 = vmatprep.subr.mxu0 0.0
    %73 = vmatpush1.msra.mxu0 0.0
    %74 = vmatprep.subr.mxu0 0.0
    %75 = vmatpush1.msra.mxu0 0.0
    %76 = vmatprep.subr.mxu0 0.0
    %77 = vmatpush1.msra.mxu0 0.0
    %78 = vmatprep.subr.mxu0 0.0
    %79 = vmatpush1.msra.mxu0 0.0
    %80 = vmatprep.subr.mxu0 0.0
    %81 = vmatpush1.msra.mxu0 0.0
    %82 = vmatprep.subr.mxu0 0.0
    %83 = vmatpush1.msra.mxu0 0.0
    %84 = vmatprep.subr.mxu0 0.0
    %85 = vmatpush1.msra.mxu0 0.0
    %86 = vmatprep.subr.mxu0 0.0
    %87 = vmatpush1.msra.mxu0 0.0
    %88 = vmatprep.subr.mxu0 0.0
    %89 = vmatpush1.msra.mxu0 0.0
    %90 = vmatprep.subr.mxu0 0.0
    %91 = vmatpush1.msra.mxu0 0.0
    %92 = vmatprep.subr.mxu0 0.0
    %93 = vmatpush1.msra.mxu0 0.0
    %94 = vmatprep.subr.mxu0 0.0
    %95 = vmatpush1.msra.mxu0 0.0
    %96 = vmatprep.subr.mxu0 0.0
    %97 = vmatpush1.msra.mxu0 0.0
    %98 = vmatprep.subr.mxu0 0.0
    %99 = vmatpush1.msra.mxu0 0.0
    %100 = vmatprep.subr.mxu0 0.0
    %101 = vmatpush1.msra.mxu0 0.0
    %102 = vmatprep.subr.mxu0 0.0
    %103 = vmatpush1.msra.mxu0 0.0
    %104 = vmatprep.subr.mxu0 0.0
    %105 = vmatpush1.msra.mxu0 0.0
    %106 = vmatprep.subr.mxu0 0.0
    %107 = vmatpush1.msra.mxu0 0.0
    %108 = vmatprep.mubr.f32.mxu0 0.0
    %109 = vmatmul.mubr.f32.gmra.mrb[0].mxu0 %v42
    %v110 = vpop.f32.mrb[0].mxu0
    %v111 = vadd.f32 %v38, %v110
    %v112 = vpop.f32.mrb[0].mxu0
    %113 = vdwg.mxu0
    %v114 = vmax.f32 %v111, 0.0
    %v115 = vld [vmem:[%s3] sm:$0xff]
    %v116 = vld [vmem:[%s3 + $0x8] sm:$0xff]
    %v117 = vld [vmem:[%s3 + $0x10] sm:$0xff]
    %v118 = vld [vmem:[%s3 + $0x18] sm:$0xff]
    %v119 = vld [vmem:[%s3 + $0x20] sm:$0xff]
    %v120 = vld [vmem:[%s3 + $0x28] sm:$0xff]
    %v121 = vld [vmem:[%s3 + $0x30] sm:$0xff]
    %v122 = vld [vmem:[%s3 + $0x38] sm:$0xff]
    %v123 = vld [vmem:[%s4] sm:$0x1]
    %v125 = vlaneseq
    %v126 = vshrl.u32 %v125, 7
    %v127 = vsub.s32 0, %v126
    %v128 = vrot.slane %v123, %v127
    %vm130 = vcmask 523264
    %v132 = vsel %vm130, %v114, 0
    %134 = vmatprep.subr.mxu0 0.0
    %135 = vmatpush1.msra.mxu0 %v115
    %136 = vmatprep.subr.mxu0 0.0
    %137 = vmatpush1.msra.mxu0 %v116
    %138 = vmatprep.subr.mxu0 0.0
    %139 = vmatpush1.msra.mxu0 %v117
    %140 = vmatprep.subr.mxu0 0.0
    %141 = vmatpush1.msra.mxu0 %v118
    %142 = vmatprep.subr.mxu0 0.0
    %143 = vmatpush1.msra.mxu0 %v119
    %144 = vmatprep.subr.mxu0 0.0
    %145 = vmatpush1.msra.mxu0 %v120
    %146 = vmatprep.subr.mxu0 0.0
    %147 = vmatpush1.msra.mxu0 %v121
    %148 = vmatprep.subr.mxu0 0.0
    %149 = vmatpush1.msra.mxu0 %v122
    %150 = vmatprep.subr.mxu0 0.0
    %151 = vmatpush1.msra.mxu0 0.0
    %152 = vmatprep.subr.mxu0 0.0
    %153 = vmatpush1.msra.mxu0 0.0
    %154 = vmatprep.subr.mxu0 0.0
    %155 = vmatpush1.msra.mxu0 0.0
    %156 = vmatprep.subr.mxu0 0.0
    %157 = vmatpush1.msra.mxu0 0.0
    %158 = vmatprep.subr.mxu0 0.0
    %159 = vmatpush1.msra.mxu0 0.0
    %160 = vmatprep.subr.mxu0 0.0
    %161 = vmatpush1.msra.mxu0 0.0
    %162 = vmatprep.subr.mxu0 0.0
    %163 = vmatpush1.msra.mxu0 0.0
    %164 = vmatprep.subr.mxu0 0.0
    %165 = vmatpush1.msra.mxu0 0.0
    %166 = vmatprep.subr.mxu0 0.0
    %167 = vmatpush1.msra.mxu0 0.0
    %168 = vmatprep.subr.mxu0 0.0
    %169 = vmatpush1.msra.mxu0 0.0
    %170 = vmatprep.subr.mxu0 0.0
    %171 = vmatpush1.msra.mxu0 0.0
    %172 = vmatprep.subr.mxu0 0.0
    %173 = vmatpush1.msra.mxu0 0.0
    %174 = vmatprep.subr.mxu0 0.0
    %175 = vmatpush1.msra.mxu0 0.0
    %176 = vmatprep.subr.mxu0 0.0
    %177 = vmatpush1.msra.mxu0 0.0
    %178 = vmatprep.subr.mxu0 0.0
    %179 = vmatpush1.msra.mxu0 0.0
    %180 = vmatprep.subr.mxu0 0.0
    %181 = vmatpush1.msra.mxu0 0.0
    %182 = vmatprep.subr.mxu0 0.0
    %183 = vmatpush1.msra.mxu0 0.0
    %184 = vmatprep.subr.mxu0 0.0
    %185 = vmatpush1.msra.mxu0 0.0
    %186 = vmatprep.subr.mxu0 0.0
    %187 = vmatpush1.msra.mxu0 0.0
    %188 = vmatprep.subr.mxu0 0.0
    %189 = vmatpush1.msra.mxu0 0.0
    %190 = vmatprep.subr.mxu0 0.0
    %191 = vmatpush1.msra.mxu0 0.0
    %192 = vmatprep.subr.mxu0 0.0
    %193 = vmatpush1.msra.mxu0 0.0
    %194 = vmatprep.subr.mxu0 0.0
    %195 = vmatpush1.msra.mxu0 0.0
    %196 = vmatprep.subr.mxu0 0.0
    %197 = vmatpush1.msra.mxu0 0.0
    %198 = vmatprep.mubr.f32.mxu0 0.0
    %199 = vmatmul.mubr.f32.gmra.mrb[0].mxu0 %v132
    %v200 = vpop.f32.mrb[0].mxu0
    %v201 = vadd.f32 %v128, %v200
    %v202 = vpop.f32.mrb[0].mxu0
    %203 = vdwg.mxu0
    %v204 = vld [vmem:[%s5] sm:$0xff]
    %v205 = vld [vmem:[%s5 + $0x8] sm:$0xff]
    %v206 = vld [vmem:[%s5 + $0x10] sm:$0xff]
    %v207 = vld [vmem:[%s5 + $0x18] sm:$0xff]
    %v208 = vld [vmem:[%s5 + $0x20] sm:$0xff]
    %v209 = vld [vmem:[%s5 + $0x28] sm:$0xff]
    %v210 = vld [vmem:[%s6] sm:$0x1]
    %v212 = vlaneseq
    %v213 = vshrl.u32 %v212, 7
    %v214 = vsub.s32 0, %v213
    %v215 = vrot.slane %v210, %v214
    %vm217 = vcmask 392192
    %v219 = vsel %vm217, %v201, 0
    %221 = vmatprep.subr.mxu0 0.0
    %222 = vmatpush1.msra.mxu0 %v204
    %223 = vmatprep.subr.mxu0 0.0
    %224 = vmatpush1.msra.mxu0 %v205
    %225 = vmatprep.subr.mxu0 0.0
    %226 = vmatpush1.msra.mxu0 %v206
    %227 = vmatprep.subr.mxu0 0.0
    %228 = vmatpush1.msra.mxu0 %v207
    %229 = vmatprep.subr.mxu0 0.0
    %230 = vmatpush1.msra.mxu0 %v208
    %231 = vmatprep.subr.mxu0 0.0
    %232 = vmatpush1.msra.mxu0 %v209
    %233 = vmatprep.subr.mxu0 0.0
    %234 = vmatpush1.msra.mxu0 0.0
    %235 = vmatprep.subr.mxu0 0.0
    %236 = vmatpush1.msra.mxu0 0.0
    %237 = vmatprep.subr.mxu0 0.0
    %238 = vmatpush1.msra.mxu0 0.0
    %239 = vmatprep.subr.mxu0 0.0
    %240 = vmatpush1.msra.mxu0 0.0
    %241 = vmatprep.subr.mxu0 0.0
    %242 = vmatpush1.msra.mxu0 0.0
    %243 = vmatprep.subr.mxu0 0.0
    %244 = vmatpush1.msra.mxu0 0.0
    %245 = vmatprep.subr.mxu0 0.0
    %246 = vmatpush1.msra.mxu0 0.0
    %247 = vmatprep.subr.mxu0 0.0
    %248 = vmatpush1.msra.mxu0 0.0
    %249 = vmatprep.subr.mxu0 0.0
    %250 = vmatpush1.msra.mxu0 0.0
    %251 = vmatprep.subr.mxu0 0.0
    %252 = vmatpush1.msra.mxu0 0.0
    %253 = vmatprep.subr.mxu0 0.0
    %254 = vmatpush1.msra.mxu0 0.0
    %255 = vmatprep.subr.mxu0 0.0
    %256 = vmatpush1.msra.mxu0 0.0
    %257 = vmatprep.subr.mxu0 0.0
    %258 = vmatpush1.msra.mxu0 0.0
    %259 = vmatprep.subr.mxu0 0.0
    %260 = vmatpush1.msra.mxu0 0.0
    %261 = vmatprep.subr.mxu0 0.0
    %262 = vmatpush1.msra.mxu0 0.0
    %263 = vmatprep.subr.mxu0 0.0
    %264 = vmatpush1.msra.mxu0 0.0
    %265 = vmatprep.subr.mxu0 0.0
    %266 = vmatpush1.msra.mxu0 0.0
    %267 = vmatprep.subr.mxu0 0.0
    %268 = vmatpush1.msra.mxu0 0.0
    %269 = vmatprep.subr.mxu0 0.0
    %270 = vmatpush1.msra.mxu0 0.0
    %271 = vmatprep.subr.mxu0 0.0
    %272 = vmatpush1.msra.mxu0 0.0
    %273 = vmatprep.subr.mxu0 0.0
    %274 = vmatpush1.msra.mxu0 0.0
    %275 = vmatprep.subr.mxu0 0.0
    %276 = vmatpush1.msra.mxu0 0.0
    %277 = vmatprep.subr.mxu0 0.0
    %278 = vmatpush1.msra.mxu0 0.0
    %279 = vmatprep.subr.mxu0 0.0
    %280 = vmatpush1.msra.mxu0 0.0
    %281 = vmatprep.subr.mxu0 0.0
    %282 = vmatpush1.msra.mxu0 0.0
    %283 = vmatprep.subr.mxu0 0.0
    %284 = vmatpush1.msra.mxu0 0.0
    %285 = vmatprep.mubr.f32.mxu0 0.0
    %286 = vmatmul.mubr.f32.gmra.mrb[0].mxu0 %v219
    %v287 = vpop.f32.mrb[0].mxu0
    %v288 = vadd.f32 %v215, %v287
    %v289 = vpop.f32.mrb[0].mxu0
    %290 = vdwg.mxu0
    %v291 = vmul.f32 %v288, %v288
    %vm292 = vcmask 130048
    %v293 = vsel %vm292, %v291, 0.0
    %294 = vadd.xlane.f32.xlu0 %v293
    %v295 = vpop.xlane.xlu0 %294
    %v296 = vmax.f32 %v295, 1e-24
    %v297 = vrsqrt.pop %v296
    %v298 = vmul.f32 %v288, %v297
    %299 = vst.msk [vmem:[#allocation2] sm:$0xff] %vm292, %v298
    // Predicated region
    $region30: #{tpu_custom_call.1} parent=1 // pred_check
      _
    $region31: #{tpu_custom_call.1} parent=1 // pred_check_branch
      %301 = sbr.rel (0) target = $region33
    $region32: #{tpu_custom_call.1} parent=1 // pred_region
      %s303 = ssub.s32 128, 128
      %304 = vsyncadd [#allocation3], %s303
      %s306 = sshll.u32 [#allocation2], 4
      %s307 = int_to_ptr.vmem [resolvable:$true] %s306
      %309 = dma.vmem_to_hbm [thread:$0]  %s307, 128, %s7, [#allocation3]
    $region33: #{tpu_custom_call.1} parent=1 // pred_fallthru
      _
    // Predicated region
    $region34: #{tpu_custom_call.1} parent=1 // pred_check
      _
    $region35: #{tpu_custom_call.1} parent=1 // pred_check_branch
      %311 = sbr.rel (0) target = $region37
    $region36: #{tpu_custom_call.1} parent=1 // pred_region
      %312 = dma.done [#allocation3], 128
    $region37: #{tpu_custom_call.1} parent=1 // pred_fallthru
      _
    %313 = vsyncpa [#allocation3], 1

</llo_original>
